<compile_context>
chip_gen: v5e
topology: v5e:2x2
jax: 0.10.0
libtpu: 0.0.40
codegen_flags: <defaults>
</compile_context>

<pallas_src>
import functools

import jax
import jax.numpy as jnp
from jax import lax
from jax.experimental import pallas as pl
from jax.experimental.pallas import tpu as pltpu


def _round_up(x, m):
    return ((x + m - 1) // m) * m


def _softplus(x):
    # numerically-stable softplus (VPU/EUP only)
    return jnp.maximum(x, 0.0) + jnp.log1p(jnp.exp(-jnp.abs(x)))


def _sigmoid(x):
    # 0.5*(tanh(x/2)+1): keeps the gate on the EUP tanh instead of a VPU divide.
    return 0.5 * (jnp.tanh(0.5 * x) + 1.0)


def _im2col_3x3(x_nchw):
    """NCHW f32 -> (B*H*W, 9*Cin) bf16 'same'-padded 3x3 patches.

    The bf16 cast happens BEFORE pad/stack so XLA fuses transpose+pad+stack+
    cast into one pass and the materialized patch array is bf16 (half the
    previous f32 bytes).
    TODO(synk): fuse this im2col fully into the Pallas kernel with halo'd
    spatial row-blocks + manual DMA to cut the dominant HBM input stream from
    ~54 B/pixel to ~6 B/pixel.
    """
    B, Cin, H, W = x_nchw.shape
    x = jnp.transpose(x_nchw, (0, 2, 3, 1)).astype(jnp.bfloat16)
    xp = jnp.pad(x, ((0, 0), (1, 1), (1, 1), (0, 0)))
    patches = jnp.stack(
        [xp[:, i:i + H, j:j + W, :] for i in range(3) for j in range(3)],
        axis=3)
    return patches.reshape(B * H * W, 9 * Cin)


def segment_kernel(patch_ref,          # (tmg, G*K0) bf16  grouped im2col patches
                   w0_ref, b0_ref,     # (G*K0, G*C) bf16, (1, G*C) f32  backbone stand-in conv
                   w1_ref, b1_ref,     # (G*C, G*A) bf16,  (1, G*A) f32  conv1 (+folded bn1)
                   w2_ref, b2_ref,     # (G*A, G)   bf16,  (1, G)   f32  conv2
                   e_ref,              # (G, G*C)   f32    per-group mask broadcast matrix
                   out_ref,            # (tmg, G*C) bf16   masked feature maps
                   *, tsub):
    nsub = patch_ref.shape[0] // tsub  # static

    # Hoist the tiny invariant operands out of the sub-chunk loop.
    w0 = w0_ref[...]
    b0 = b0_ref[...]
    w1 = w1_ref[...]
    b1 = b1_ref[...]
    w2 = w2_ref[...]
    b2 = b2_ref[...]
    e = e_ref[...]

    def body(s, carry):
        r0 = pl.multiple_of(s * tsub, tsub)
        p = patch_ref[pl.ds(r0, tsub), :]

        # ---- stand-in resnet_convs: 3x3 conv (im2col matmul) + ReLU --------
        fmap32 = jnp.dot(p, w0, preferred_element_type=jnp.float32) + b0
        fmap32 = jnp.maximum(fmap32, 0.0)                  # (tsub, G*C) f32
        fmap = fmap32.astype(jnp.bfloat16)                 # halve temp footprint

        # ---- attention = relu(bn1(conv1(fmaps)))  (bn folded into w1/b1) ---
        att = jnp.dot(fmap, w1, preferred_element_type=jnp.float32) + b1
        att = jnp.maximum(att, 0.0).astype(jnp.bfloat16)   # (tsub, G*A)

        # ---- attention = softplus(conv2(attention)) -------------------------
        score = jnp.dot(att, w2, preferred_element_type=jnp.float32) + b2
        score = _softplus(score)                           # (tsub, G) f32

        # ---- mask = sigmoid(100 * (attention - 0.85)), kept fully in f32 ----
        mask = _sigmoid(100.0 * (score - 0.85))            # (tsub, G)

        # ---- masked_fmaps = mask * feature_maps ------------------------------
        # Broadcast each pixel's mask over its C channels inside the grouped
        # row via a tiny (G, G*C) 0/1 matmul (lane-dense, no relayouts).
        mask_b = jnp.dot(mask, e, preferred_element_type=jnp.float32)
        out_ref[pl.ds(r0, tsub), :] = (mask_b * fmap).astype(out_ref.dtype)
        return carry

    lax.fori_loop(0, nsub, body, 0, unroll=True)


def segment_forward(x_nchw, params, *, tmg=8192, tsub=512, out_format="NCHW_F32"):
    """x_nchw: (B, Cin, H, W) float32.

    tmg  = grouped rows per grid step (each grouped row carries G pixels).
    tsub = grouped rows per in-kernel sub-chunk (bounds f32 temporaries).
    out_format: "NCHW_F32" (PyTorch parity, extra HBM pass) or "NHWC_BF16".
    """
    w0, b0, w1, b1, bn_scale, bn_shift, w2, b2 = params
    B, Cin, H, W = x_nchw.shape
    K0, C = w0.shape
    A = w1.shape[1]

    # pixels per grouped row so fmap/output rows are exactly 128 lanes wide.
    # NOTE: 128 % C != 0 falls back to G=1 (correct, but stores are no longer
    # lane-dense — a known perf cliff for non-power-of-two channel counts).
    G = 128 // C if (128 % C == 0) else 1

    # ---- glue: bf16 im2col for the 3x3 stand-in conv (single fused pass) ----
    patches = _im2col_3x3(x_nchw)                 # (N, K0) bf16
    N = B * H * W
    NG = -(-N // G)                               # grouped rows needed

    # ---- tiling heuristic ----------------------------------------------------
    # * shrink the sub-chunk / block for tiny inputs (no wasted padded rows)
    # * balance blocks so padding waste stays < tsub per block
    # * keep >= 2 grid steps when there is enough data so v7x megacore can
    #   shard the "parallel" grid across its 2 TensorCores.
    tsub = _round_up(min(tsub, _round_up(NG, 8)), 8)
    tmg = _round_up(max(tmg, tsub), tsub)
    nblocks = -(-NG // tmg)
    if NG >= 2 * tsub:
        nblocks = max(nblocks, 2)
    tmg = _round_up(-(-NG // nblocks), tsub)
    NG_pad = nblocks * tmg
    rows_pad = NG_pad * G

    patches = jnp.pad(patches, ((0, rows_pad - N), (0, 0)))
    patches_g = patches.reshape(NG_pad, G * K0)   # bf16

    # ---- fold bn1 (eval) into conv1; expand weights to per-group block-diag -
    w1f = w1 * bn_scale
    b1f = b1 * bn_scale + bn_shift
    eyeg = jnp.eye(G, dtype=jnp.float32)
    w0g = jnp.kron(eyeg, w0).astype(jnp.bfloat16)          # (G*K0, G*C)
    b0g = jnp.tile(b0, (1, G))                             # (1, G*C)
    w1g = jnp.kron(eyeg, w1f).astype(jnp.bfloat16)         # (G*C, G*A)
    b1g = jnp.tile(b1f, (1, G))                            # (1, G*A)
    w2g = jnp.kron(eyeg, w2).astype(jnp.bfloat16)          # (G*A, G)
    b2g = jnp.tile(b2, (1, G))                             # (1, G)
    eg = jnp.kron(eyeg, jnp.ones((1, C), jnp.float32))     # (G, G*C)

    rows = lambda i: (i, 0)
    full = lambda i: (0, 0)

    # NOTE: the 7 invariant operands total ~50 KiB, so double-buffering them
    # costs ~50 KiB of VMEM — negligible; pl.Buffered(1) deliberately omitted.
    out = pl.pallas_call(
        functools.partial(segment_kernel, tsub=tsub),
        out_shape=jax.ShapeDtypeStruct((NG_pad, G * C), jnp.bfloat16),
        grid_spec=pltpu.PrefetchScalarGridSpec(
            num_scalar_prefetch=0,
            grid=(NG_pad // tmg,),
            in_specs=[
                pl.BlockSpec((tmg, G * K0), rows),    # grouped patches (bf16)
                pl.BlockSpec((G * K0, G * C), full),  # w0 (block-diag, bf16)
                pl.BlockSpec((1, G * C), full),       # b0 (f32)
                pl.BlockSpec((G * C, G * A), full),   # w1 (bn folded, bf16)
                pl.BlockSpec((1, G * A), full),       # b1 (f32)
                pl.BlockSpec((G * A, G), full),       # w2 (block-diag, bf16)
                pl.BlockSpec((1, G), full),           # b2 (f32)
                pl.BlockSpec((G, G * C), full),       # mask broadcast matrix
            ],
            out_specs=pl.BlockSpec((tmg, G * C), rows),
        ),
        compiler_params=pltpu.CompilerParams(
            dimension_semantics=("parallel",),
            # Does real work on v5e (16 MiB default scoped VMEM); a no-op on
            # v6e; safely below v7x's 64 MiB physical VMEM.  The in-kernel
            # sub-chunking keeps the working set ~8 MiB even at tmg=8192.
            vmem_limit_bytes=32 * 1024 * 1024),
    )(patches_g, w0g, b0g, w1g, b1g, w2g, b2g, eg)

    out = out.reshape(NG_pad * G, C)[:N].reshape(B, H, W, C)
    if out_format == "NHWC_BF16":
        # TODO(synk): prefer this path when downstream consumes NHWC bf16 — it
        # skips a full extra HBM pass (NHWC->NCHW transpose + f32 upcast).
        return out
    return jnp.transpose(out, (0, 3, 1, 2)).astype(jnp.float32)


def segment_reference(x_nchw, params, ret_all=False):
    """Pure-JAX reference mirroring the PyTorch forward.

    Mirrors the kernel's bf16 roundings (patches, w0, fmap, w1, att, w2) so
    the sharp 100x sigmoid gate sees identical inputs; matmuls run in f32 with
    HIGHEST precision (matching the kernel's f32 MXU accumulation).
    """
    w0, b0, w1, b1, bn_scale, bn_shift, w2, b2 = params
    B, Cin, H, W = x_nchw.shape
    C = w0.shape[1]
    hi = lax.Precision.HIGHEST
    bf = lambda a: a.astype(jnp.bfloat16).astype(jnp.float32)

    patches = _im2col_3x3(x_nchw).astype(jnp.float32)     # already bf16-rounded
    fmap = jnp.maximum(jnp.dot(patches, bf(w0), precision=hi) + b0, 0.0)
    fmap_q = bf(fmap)                                     # kernel keeps fmap in bf16
    w1f = w1 * bn_scale
    b1f = b1 * bn_scale + bn_shift
    att = jnp.maximum(jnp.dot(fmap_q, bf(w1f), precision=hi) + b1f, 0.0)
    att_q = bf(att)
    score = _softplus(jnp.dot(att_q, bf(w2), precision=hi) + b2)   # "attention"
    mask = _sigmoid(100.0 * (score - 0.85))
    masked = mask * fmap_q

    to_nchw = lambda a: jnp.transpose(a.reshape(B, H, W, -1), (0, 3, 1, 2))
    if ret_all:
        return to_nchw(score), to_nchw(mask), to_nchw(fmap_q), to_nchw(masked)
    return to_nchw(masked)


def make_params(key, cin=3, c=32, a=16):
    """Deterministic synthetic parameters (shapes implied by the module)."""
    ks = jax.random.split(key, 8)
    k0 = 9 * cin
    w0 = jax.random.normal(ks[0], (k0, c), jnp.float32) * 0.2
    b0 = jax.random.normal(ks[1], (1, c), jnp.float32) * 0.05
    w1 = jax.random.normal(ks[2], (c, a), jnp.float32) * 0.2   # conv1: 1x1, C -> A
    b1 = jax.random.normal(ks[3], (1, a), jnp.float32) * 0.05
    # bn1 (eval mode) folded into per-channel scale/shift
    gamma = 1.0 + 0.1 * jax.random.normal(ks[4], (1, a), jnp.float32)
    beta = 0.05 * jax.random.normal(ks[5], (1, a), jnp.float32)
    run_mean = 0.1 * jax.random.normal(ks[6], (1, a), jnp.float32)
    run_var = jnp.abs(jax.random.normal(ks[7], (1, a), jnp.float32)) + 0.5
    eps = 1e-5
    bn_scale = gamma / jnp.sqrt(run_var + eps)
    bn_shift = beta - run_mean * bn_scale
    w2 = jax.random.normal(jax.random.PRNGKey(42), (a, 1), jnp.float32) * 0.2  # conv2: 1x1, A -> 1
    b2 = jnp.full((1, 1), 0.1, jnp.float32)
    return (w0, b0, w1, b1, bn_scale, bn_shift, w2, b2)


if __name__ == "__main__":
    key = jax.random.PRNGKey(0)
    kx, kp = jax.random.split(key)

    B, Cin, H, W = 2, 3, 16, 16
    x = jax.random.normal(kx, (B, Cin, H, W), jnp.float32)
    params = make_params(kp, cin=Cin, c=32, a=16)

    # Reference + threshold-aware tolerance: the 100x gate is extremely sharp,
    # so pixels whose softplus score sits essentially on the 0.85 threshold are
    # excluded from the elementwise comparison (mask can legitimately flip).
    att, mask, fmaps, ref = segment_reference(x, params, ret_all=True)
    near_threshold = jnp.abs(att - 0.85) < 5e-3            # (B, 1, H, W)

    def check(out):
        ok = jnp.abs(out - ref) <= 2e-2 + 2e-2 * jnp.abs(ref)
        return bool(jnp.all(ok | near_threshold))

    # 1) production tiling (single big block for this tiny demo input)
    run_default = jax.jit(segment_forward)
    out_default = jax.block_until_ready(run_default(x, params))
    assert out_default.shape == (B, 32, H, W)
    assert check(out_default), "mismatch vs reference (default tiling)"

    # 2) small tiles to exercise the multi-step grid + in-kernel sub-chunk loop
    run_tiled = jax.jit(functools.partial(segment_forward, tmg=32, tsub=16))
    out_tiled = jax.block_until_ready(run_tiled(x, params))
    assert check(out_tiled), "mismatch vs reference (multi-step tiling)"

    print("KERNEL_OK")
</pallas_src>

<mosaic_0001>
module attributes {stable_mosaic.version = 11 : i64} {
  func.func @segment_kernel(%arg0: i32, %arg1: memref<128x108xbf16, #tpu.memory_space<vmem>>, %arg2: memref<108x128xbf16, #tpu.memory_space<vmem>>, %arg3: memref<1x128xf32, #tpu.memory_space<vmem>>, %arg4: memref<128x64xbf16, #tpu.memory_space<vmem>>, %arg5: memref<1x64xf32, #tpu.memory_space<vmem>>, %arg6: memref<64x4xbf16, #tpu.memory_space<vmem>>, %arg7: memref<1x4xf32, #tpu.memory_space<vmem>>, %arg8: memref<4x128xf32, #tpu.memory_space<vmem>>, %arg9: memref<128x128xbf16, #tpu.memory_space<vmem>>) attributes {dimension_semantics = [#tpu.dimension_semantics<parallel>], iteration_bounds = array<i64: 1>, scalar_prefetch = 0 : i64, scratch_operands = 0 : i64, tpu.core_type = #tpu.core_type<tc>, window_params = [{transform_indices = @transform_0, window_bounds = array<i64: 128, 108>}, {pipeline_mode = #tpu.pipeline_mode<synchronous>, transform_indices = @transform_1, window_bounds = array<i64: 108, 128>}, {pipeline_mode = #tpu.pipeline_mode<synchronous>, transform_indices = @transform_2, window_bounds = array<i64: 1, 128>}, {pipeline_mode = #tpu.pipeline_mode<synchronous>, transform_indices = @transform_3, window_bounds = array<i64: 128, 64>}, {pipeline_mode = #tpu.pipeline_mode<synchronous>, transform_indices = @transform_4, window_bounds = array<i64: 1, 64>}, {pipeline_mode = #tpu.pipeline_mode<synchronous>, transform_indices = @transform_5, window_bounds = array<i64: 64, 4>}, {pipeline_mode = #tpu.pipeline_mode<synchronous>, transform_indices = @transform_6, window_bounds = array<i64: 1, 4>}, {pipeline_mode = #tpu.pipeline_mode<synchronous>, transform_indices = @transform_7, window_bounds = array<i64: 4, 128>}, {transform_indices = @transform_8, window_bounds = array<i64: 128, 128>}]} {
    %c0 = arith.constant 0 : index
    %c0_0 = arith.constant 0 : index
    %0 = vector.load %arg2[%c0, %c0_0] : memref<108x128xbf16, #tpu.memory_space<vmem>>, vector<108x128xbf16>
    %c0_1 = arith.constant 0 : index
    %c0_2 = arith.constant 0 : index
    %1 = vector.load %arg3[%c0_1, %c0_2] : memref<1x128xf32, #tpu.memory_space<vmem>>, vector<1x128xf32>
    %c0_3 = arith.constant 0 : index
    %c0_4 = arith.constant 0 : index
    %2 = vector.load %arg4[%c0_3, %c0_4] : memref<128x64xbf16, #tpu.memory_space<vmem>>, vector<128x64xbf16>
    %c0_5 = arith.constant 0 : index
    %c0_6 = arith.constant 0 : index
    %3 = vector.load %arg5[%c0_5, %c0_6] : memref<1x64xf32, #tpu.memory_space<vmem>>, vector<1x64xf32>
    %c0_7 = arith.constant 0 : index
    %c0_8 = arith.constant 0 : index
    %4 = vector.load %arg6[%c0_7, %c0_8] : memref<64x4xbf16, #tpu.memory_space<vmem>>, vector<64x4xbf16>
    %c0_9 = arith.constant 0 : index
    %c0_10 = arith.constant 0 : index
    %5 = vector.load %arg7[%c0_9, %c0_10] : memref<1x4xf32, #tpu.memory_space<vmem>>, vector<1x4xf32>
    %c0_11 = arith.constant 0 : index
    %c0_12 = arith.constant 0 : index
    %6 = vector.load %arg8[%c0_11, %c0_12] : memref<4x128xf32, #tpu.memory_space<vmem>>, vector<4x128xf32>
    %c0_i32 = arith.constant 0 : i32
    %c128_i32 = arith.constant 128 : i32
    %7 = arith.muli %c0_i32, %c128_i32 : i32
    %8 = tpu.assume_multiple %7, 128 : i32
    %9 = arith.index_cast %8 : i32 to index
    %c0_13 = arith.constant 0 : index
    %10 = vector.load %arg1[%9, %c0_13] : memref<128x108xbf16, #tpu.memory_space<vmem>>, vector<128x108xbf16>
    %cst = arith.constant dense<0.000000e+00> : vector<128x128xf32>
    %11 = tpu.matmul %10, %0, %cst {dimension_numbers = #tpu.dot_dimension_numbers<[1], [0], [0], [1], [0, 0, 1, 1], [], []>} : vector<128x108xbf16>, vector<108x128xbf16>, vector<128x128xf32> -> vector<128x128xf32>
    %12 = vector.broadcast %1 : vector<1x128xf32> to vector<128x128xf32>
    %13 = arith.addf %11, %12 : vector<128x128xf32>
    %cst_14 = arith.constant 0.000000e+00 : f32
    %14 = vector.broadcast %cst_14 : f32 to vector<128x128xf32>
    %15 = arith.maximumf %13, %14 : vector<128x128xf32>
    %16 = arith.truncf %15 : vector<128x128xf32> to vector<128x128xbf16>
    %cst_15 = arith.constant dense<0.000000e+00> : vector<128x64xf32>
    %17 = tpu.matmul %16, %2, %cst_15 {dimension_numbers = #tpu.dot_dimension_numbers<[1], [0], [0], [1], [0, 0, 1, 1], [], []>} : vector<128x128xbf16>, vector<128x64xbf16>, vector<128x64xf32> -> vector<128x64xf32>
    %18 = vector.broadcast %3 : vector<1x64xf32> to vector<128x64xf32>
    %19 = arith.addf %17, %18 : vector<128x64xf32>
    %cst_16 = arith.constant 0.000000e+00 : f32
    %20 = vector.broadcast %cst_16 : f32 to vector<128x64xf32>
    %21 = arith.maximumf %19, %20 : vector<128x64xf32>
    %22 = arith.truncf %21 : vector<128x64xf32> to vector<128x64xbf16>
    %cst_17 = arith.constant dense<0.000000e+00> : vector<128x4xf32>
    %23 = tpu.matmul %22, %4, %cst_17 {dimension_numbers = #tpu.dot_dimension_numbers<[1], [0], [0], [1], [0, 0, 1, 1], [], []>} : vector<128x64xbf16>, vector<64x4xbf16>, vector<128x4xf32> -> vector<128x4xf32>
    %24 = vector.broadcast %5 : vector<1x4xf32> to vector<128x4xf32>
    %25 = arith.addf %23, %24 : vector<128x4xf32>
    %cst_18 = arith.constant 0.000000e+00 : f32
    %26 = vector.broadcast %cst_18 : f32 to vector<128x4xf32>
    %27 = arith.maximumf %25, %26 : vector<128x4xf32>
    %28 = math.absf %25 : vector<128x4xf32>
    %cst_19 = arith.constant 0.000000e+00 : f32
    %29 = vector.broadcast %cst_19 : f32 to vector<128x4xf32>
    %30 = arith.subf %29, %28 : vector<128x4xf32>
    %31 = math.exp %30 : vector<128x4xf32>
    %32 = math.log1p %31 : vector<128x4xf32>
    %33 = arith.addf %27, %32 : vector<128x4xf32>
    %cst_20 = arith.constant 8.500000e-01 : f32
    %34 = vector.broadcast %cst_20 : f32 to vector<128x4xf32>
    %35 = arith.subf %33, %34 : vector<128x4xf32>
    %cst_21 = arith.constant 1.000000e+02 : f32
    %36 = vector.broadcast %cst_21 : f32 to vector<128x4xf32>
    %37 = arith.mulf %36, %35 : vector<128x4xf32>
    %cst_22 = arith.constant 5.000000e-01 : f32
    %38 = vector.broadcast %cst_22 : f32 to vector<128x4xf32>
    %39 = arith.mulf %38, %37 : vector<128x4xf32>
    %40 = math.tanh %39 : vector<128x4xf32>
    %cst_23 = arith.constant 1.000000e+00 : f32
    %41 = vector.broadcast %cst_23 : f32 to vector<128x4xf32>
    %42 = arith.addf %40, %41 : vector<128x4xf32>
    %cst_24 = arith.constant 5.000000e-01 : f32
    %43 = vector.broadcast %cst_24 : f32 to vector<128x4xf32>
    %44 = arith.mulf %43, %42 : vector<128x4xf32>
    %cst_25 = arith.constant dense<0.000000e+00> : vector<128x128xf32>
    %45 = tpu.matmul %44, %6, %cst_25 {dimension_numbers = #tpu.dot_dimension_numbers<[1], [0], [0], [1], [0, 0, 1, 1], [], []>} : vector<128x4xf32>, vector<4x128xf32>, vector<128x128xf32> -> vector<128x128xf32>
    %46 = arith.extf %16 : vector<128x128xbf16> to vector<128x128xf32>
    %47 = arith.mulf %45, %46 : vector<128x128xf32>
    %48 = arith.truncf %47 : vector<128x128xf32> to vector<128x128xbf16>
    %49 = arith.index_cast %8 : i32 to index
    %c0_26 = arith.constant 0 : index
    %50 = vector.load %arg9[%49, %c0_26] : memref<128x128xbf16, #tpu.memory_space<vmem>>, vector<128x128xbf16>
    tpu.vector_store %arg9[%49, %c0_26], %48 {strides = array<i32>} : memref<128x128xbf16, #tpu.memory_space<vmem>>, vector<128x128xbf16>,
    %c1_i32 = arith.constant 1 : i32
    return
  }
  func.func @transform_0(%arg0: i32) -> (i32, i32) {
    %c0_i32 = arith.constant 0 : i32
    %c0_i32_0 = arith.constant 0 : i32
    return %arg0, %c0_i32 : i32, i32
  }
  func.func @transform_1(%arg0: i32) -> (i32, i32) {
    %c0_i32 = arith.constant 0 : i32
    %c0_i32_0 = arith.constant 0 : i32
    %c0_i32_1 = arith.constant 0 : i32
    return %c0_i32, %c0_i32_0 : i32, i32
  }
  func.func @transform_2(%arg0: i32) -> (i32, i32) {
    %c0_i32 = arith.constant 0 : i32
    %c0_i32_0 = arith.constant 0 : i32
    %c0_i32_1 = arith.constant 0 : i32
    return %c0_i32, %c0_i32_0 : i32, i32
  }
  func.func @transform_3(%arg0: i32) -> (i32, i32) {
    %c0_i32 = arith.constant 0 : i32
    %c0_i32_0 = arith.constant 0 : i32
    %c0_i32_1 = arith.constant 0 : i32
    return %c0_i32, %c0_i32_0 : i32, i32
  }
  func.func @transform_4(%arg0: i32) -> (i32, i32) {
    %c0_i32 = arith.constant 0 : i32
    %c0_i32_0 = arith.constant 0 : i32
    %c0_i32_1 = arith.constant 0 : i32
    return %c0_i32, %c0_i32_0 : i32, i32
  }
  func.func @transform_5(%arg0: i32) -> (i32, i32) {
    %c0_i32 = arith.constant 0 : i32
    %c0_i32_0 = arith.constant 0 : i32
    %c0_i32_1 = arith.constant 0 : i32
    return %c0_i32, %c0_i32_0 : i32, i32
  }
  func.func @transform_6(%arg0: i32) -> (i32, i32) {
    %c0_i32 = arith.constant 0 : i32
    %c0_i32_0 = arith.constant 0 : i32
    %c0_i32_1 = arith.constant 0 : i32
    return %c0_i32, %c0_i32_0 : i32, i32
  }
  func.func @transform_7(%arg0: i32) -> (i32, i32) {
    %c0_i32 = arith.constant 0 : i32
    %c0_i32_0 = arith.constant 0 : i32
    %c0_i32_1 = arith.constant 0 : i32
    return %c0_i32, %c0_i32_0 : i32, i32
  }
  func.func @transform_8(%arg0: i32) -> (i32, i32) {
    %c0_i32 = arith.constant 0 : i32
    %c0_i32_0 = arith.constant 0 : i32
    return %arg0, %c0_i32 : i32, i32
  }
}

</mosaic_0001>

<llo_original>
// kernel: segment_forward.1
$region0: #{segment_forward.1}
  #allocation0 [shape = 'u32[]', space=smem, size = 0x4, offset = 0x4, fixed_abs, tag = 'smem constant byte address 0x4 - core index']
  #allocation1 [shape = 'u32[72,128]{1,0:T(1,128)}', space=vmem, size = 0x9000, scoped, tag = 'internal scratch']
  %s0 = inlined_call_operand.vmem [shape: bf16[128,108], index: 0, kind: input, shape index: {}]
  %s1 = inlined_call_operand.vmem [shape: bf16[108,128], index: 1, kind: input, shape index: {}]
  %s2 = inlined_call_operand.vmem [shape: f32[1,128], index: 2, kind: input, shape index: {}]
  %s3 = inlined_call_operand.vmem [shape: bf16[128,64], index: 3, kind: input, shape index: {}]
  %s4 = inlined_call_operand.vmem [shape: f32[1,64], index: 4, kind: input, shape index: {}]
  %s5 = inlined_call_operand.vmem [shape: bf16[64,4], index: 5, kind: input, shape index: {}]
  %s6 = inlined_call_operand.vmem [shape: f32[1,4], index: 6, kind: input, shape index: {}]
  %s7 = inlined_call_operand.vmem [shape: f32[4,128], index: 7, kind: input, shape index: {}]
  %s8 = inlined_call_operand.vmem [shape: bf16[128,128], index: 8, kind: output, shape index: {}]
  %s9 = sld [smem:[#allocation0]]
  $region42: #{segment_forward.1} parent=0
    _
  %s11 = ssub.s32 1, %s9
  %s12 = scalar_select 0, %s11, %s9
  // Predicated region
  $region2: #{segment_forward.1} parent=0 // pred_check
    _
  $region3: #{segment_forward.1} parent=0 // pred_check_branch
    %14 = sbr.rel (0) target = $region5
  $region4: #{segment_forward.1} parent=0 // pred_region
    _
  $region5: #{segment_forward.1} parent=0 // pred_fallthru
    _
  // Predicated region
  $region6: #{segment_forward.1} parent=0 // pred_check
    _
  $region7: #{segment_forward.1} parent=0 // pred_check_branch
    %16 = sbr.rel (0) target = $region9
  $region8: #{segment_forward.1} parent=0 // pred_region
    _
  $region9: #{segment_forward.1} parent=0 // pred_fallthru
    _
  // Predicated region
  $region10: #{segment_forward.1} parent=0 // pred_check
    _
  $region11: #{segment_forward.1} parent=0 // pred_check_branch
    %18 = sbr.rel (0) target = $region13
  $region12: #{segment_forward.1} parent=0 // pred_region
    _
  $region13: #{segment_forward.1} parent=0 // pred_fallthru
    _
  // Predicated region
  $region14: #{segment_forward.1} parent=0 // pred_check
    _
  $region15: #{segment_forward.1} parent=0 // pred_check_branch
    %20 = sbr.rel (0) target = $region17
  $region16: #{segment_forward.1} parent=0 // pred_region
    _
  $region17: #{segment_forward.1} parent=0 // pred_fallthru
    _
  // Predicated region
  $region18: #{segment_forward.1} parent=0 // pred_check
    _
  $region19: #{segment_forward.1} parent=0 // pred_check_branch
    %22 = sbr.rel (0) target = $region21
  $region20: #{segment_forward.1} parent=0 // pred_region
    _
  $region21: #{segment_forward.1} parent=0 // pred_fallthru
    _
  // Predicated region
  $region22: #{segment_forward.1} parent=0 // pred_check
    _
  $region23: #{segment_forward.1} parent=0 // pred_check_branch
    %24 = sbr.rel (0) target = $region25
  $region24: #{segment_forward.1} parent=0 // pred_region
    _
  $region25: #{segment_forward.1} parent=0 // pred_fallthru
    _
  // Predicated region
  $region26: #{segment_forward.1} parent=0 // pred_check
    _
  $region27: #{segment_forward.1} parent=0 // pred_check_branch
    %26 = sbr.rel (0) target = $region29
  $region28: #{segment_forward.1} parent=0 // pred_region
    _
  $region29: #{segment_forward.1} parent=0 // pred_fallthru
    _
  // Predicated region
  $region30: #{segment_forward.1} parent=0 // pred_check
    _
  $region31: #{segment_forward.1} parent=0 // pred_check_branch
    %28 = sbr.rel (0) target = $region33
  $region32: #{segment_forward.1} parent=0 // pred_region
    _
  $region33: #{segment_forward.1} parent=0 // pred_fallthru
    _
  %v30 = vld [vmem:[%s1] sm:$0xf]
  %v31 = vld [vmem:[%s1 + $0x4] sm:$0xf]
  %v32 = vld [vmem:[%s1 + $0x8] sm:$0xf]
  %v33 = vld [vmem:[%s1 + $0xc] sm:$0xf]
  %v34 = vld [vmem:[%s1 + $0x10] sm:$0xf]
  %v35 = vld [vmem:[%s1 + $0x14] sm:$0xf]
  %v36 = vld [vmem:[%s1 + $0x18] sm:$0xf]
  %v37 = vld [vmem:[%s1 + $0x1c] sm:$0xf]
  %v38 = vld [vmem:[%s1 + $0x20] sm:$0xf]
  %v39 = vld [vmem:[%s1 + $0x24] sm:$0xf]
  %v40 = vld [vmem:[%s1 + $0x28] sm:$0xf]
  %v41 = vld [vmem:[%s1 + $0x2c] sm:$0xf]
  %v42 = vld [vmem:[%s1 + $0x30] sm:$0xf]
  %v43 = vld [vmem:[%s1 + $0x34] sm:$0x3]
  %v44 = vld [vmem:[%s2] sm:$0x1]
  %v45 = vld [vmem:[%s3] sm:$0xf]
  %v46 = vld [vmem:[%s3 + $0x4] sm:$0xf]
  %v47 = vld [vmem:[%s3 + $0x8] sm:$0xf]
  %v48 = vld [vmem:[%s3 + $0xc] sm:$0xf]
  %v49 = vld [vmem:[%s3 + $0x10] sm:$0xf]
  %v50 = vld [vmem:[%s3 + $0x14] sm:$0xf]
  %v51 = vld [vmem:[%s3 + $0x18] sm:$0xf]
  %v52 = vld [vmem:[%s3 + $0x1c] sm:$0xf]
  %v53 = vld [vmem:[%s3 + $0x20] sm:$0xf]
  %v54 = vld [vmem:[%s3 + $0x24] sm:$0xf]
  %v55 = vld [vmem:[%s3 + $0x28] sm:$0xf]
  %v56 = vld [vmem:[%s3 + $0x2c] sm:$0xf]
  %v57 = vld [vmem:[%s3 + $0x30] sm:$0xf]
  %v58 = vld [vmem:[%s3 + $0x34] sm:$0xf]
  %v59 = vld [vmem:[%s3 + $0x38] sm:$0xf]
  %v60 = vld [vmem:[%s3 + $0x3c] sm:$0xf]
  %v61 = vld [vmem:[%s4] sm:$0x1]
  %v62 = vld [vmem:[%s5] sm:$0xf]
  %v63 = vld [vmem:[%s5 + $0x4] sm:$0xf]
  %v64 = vld [vmem:[%s5 + $0x8] sm:$0xf]
  %v65 = vld [vmem:[%s5 + $0xc] sm:$0xf]
  %v66 = vld [vmem:[%s5 + $0x10] sm:$0xf]
  %v67 = vld [vmem:[%s5 + $0x14] sm:$0xf]
  %v68 = vld [vmem:[%s5 + $0x18] sm:$0xf]
  %v69 = vld [vmem:[%s5 + $0x1c] sm:$0xf]
  %v70 = vld [vmem:[%s6] sm:$0x1]
  %v71 = vld [vmem:[%s7] sm:$0xf]
  %v72 = vld [vmem:[%s0] sm:$0xf]
  %v73 = vld [vmem:[%s0 + $0x4] sm:$0xf]
  %v74 = vld [vmem:[%s0 + $0x8] sm:$0xf]
  %v75 = vld [vmem:[%s0 + $0xc] sm:$0xf]
  %v76 = vld [vmem:[%s0 + $0x10] sm:$0xf]
  %v77 = vld [vmem:[%s0 + $0x14] sm:$0xf]
  %v78 = vld [vmem:[%s0 + $0x18] sm:$0xf]
  %v79 = vld [vmem:[%s0 + $0x1c] sm:$0xf]
  %v80 = vld [vmem:[%s0 + $0x20] sm:$0xf]
  %v81 = vld [vmem:[%s0 + $0x24] sm:$0xf]
  %v82 = vld [vmem:[%s0 + $0x28] sm:$0xf]
  %v83 = vld [vmem:[%s0 + $0x2c] sm:$0xf]
  %v84 = vld [vmem:[%s0 + $0x30] sm:$0xf]
  %v85 = vld [vmem:[%s0 + $0x34] sm:$0xf]
  %v86 = vld [vmem:[%s0 + $0x38] sm:$0xf]
  %v87 = vld [vmem:[%s0 + $0x3c] sm:$0xf]
  %v89 = vperm.slane %v44, 0
  %v107 = vunpack.c.l.b16 %v72
  %v108 = vunpack.c.l.b16 %v73
  %v109 = vunpack.c.l.b16 %v74
  %v110 = vunpack.c.l.b16 %v75
  %v111 = vunpack.c.l.b16 %v76
  %v112 = vunpack.c.l.b16 %v77
  %v113 = vunpack.c.l.b16 %v78
  %v114 = vunpack.c.l.b16 %v79
  %v115 = vunpack.c.l.b16 %v80
  %v116 = vunpack.c.l.b16 %v81
  %v117 = vunpack.c.l.b16 %v82
  %v118 = vunpack.c.l.b16 %v83
  %v119 = vunpack.c.l.b16 %v84
  %v120 = vunpack.c.l.b16 %v85
  %v121 = vunpack.c.l.b16 %v86
  %v122 = vunpack.c.l.b16 %v87
  %v123 = vpack.c.b16 %v108, %v107
  %v124 = vpack.c.b16 %v110, %v109
  %v125 = vpack.c.b16 %v112, %v111
  %v126 = vpack.c.b16 %v114, %v113
  %v127 = vpack.c.b16 %v116, %v115
  %v128 = vpack.c.b16 %v118, %v117
  %v129 = vpack.c.b16 %v120, %v119
  %v130 = vpack.c.b16 %v122, %v121
  %v145 = vunpack.c.l.b16 %v30
  %v146 = vunpack.c.l.b16 %v31
  %v147 = vunpack.c.l.b16 %v32
  %v148 = vunpack.c.l.b16 %v33
  %v149 = vunpack.c.l.b16 %v34
  %v150 = vunpack.c.l.b16 %v35
  %v151 = vunpack.c.l.b16 %v36
  %v152 = vunpack.c.l.b16 %v37
  %v153 = vunpack.c.l.b16 %v38
  %v154 = vunpack.c.l.b16 %v39
  %v155 = vunpack.c.l.b16 %v40
  %v156 = vunpack.c.l.b16 %v41
  %v157 = vunpack.c.l.b16 %v42
  %v158 = vunpack.c.l.b16 %v43
  %v159 = vpack.c.b16 %v146, %v145
  %v160 = vpack.c.b16 %v148, %v147
  %v161 = vpack.c.b16 %v150, %v149
  %v162 = vpack.c.b16 %v152, %v151
  %v163 = vpack.c.b16 %v154, %v153
  %v164 = vpack.c.b16 %v156, %v155
  %v165 = vpack.c.b16 %v158, %v157
  %vm172 = vcmask 883712
  %v174 = vsel %vm172, %v123, 0
  %v177 = vsel %vm172, %v124, 0
  %v180 = vsel %vm172, %v125, 0
  %v183 = vsel %vm172, %v126, 0
  %v186 = vsel %vm172, %v127, 0
  %v189 = vsel %vm172, %v128, 0
  %v192 = vsel %vm172, %v129, 0
  %v195 = vsel %vm172, %v130, 0
  %vm197 = vcmask 1045504
  %v199 = vsel %vm197, %v165, 0
  %201 = vmatpush.bf16.msra.mxu0 0
  %202 = vmatpush.bf16.msra.mxu0 %v199
  %203 = vmatpush.bf16.msra.mxu0 %v164
  %204 = vmatpush.bf16.msra.mxu0 %v163
  %205 = vmatpush.bf16.msra.mxu0 %v162
  %206 = vmatpush.bf16.msra.mxu0 %v161
  %207 = vmatpush.bf16.msra.mxu0 %v160
  %208 = vmatpush.bf16.msra.mxu0 %v159
  %209 = vmatmul.bf16.gmra.mxu0 %v174
  %v210 = vpop.f32.mrf.mxu0
  %v211 = vadd.f32 %v89, %v210
  %v212 = vpop.f32.mrf.mxu0
  %v213 = vadd.f32 %v89, %v212
  %214 = vmatmul.bf16.gmra.mxu0 %v177
  %v215 = vpop.f32.mrf.mxu0
  %v216 = vadd.f32 %v89, %v215
  %v217 = vpop.f32.mrf.mxu0
  %v218 = vadd.f32 %v89, %v217
  %219 = vmatmul.bf16.gmra.mxu0 %v180
  %v220 = vpop.f32.mrf.mxu0
  %v221 = vadd.f32 %v89, %v220
  %v222 = vpop.f32.mrf.mxu0
  %v223 = vadd.f32 %v89, %v222
  %224 = vmatmul.bf16.gmra.mxu0 %v183
  %v225 = vpop.f32.mrf.mxu0
  %v226 = vadd.f32 %v89, %v225
  %v227 = vpop.f32.mrf.mxu0
  %v228 = vadd.f32 %v89, %v227
  %229 = vmatmul.bf16.gmra.mxu0 %v186
  %v230 = vpop.f32.mrf.mxu0
  %v231 = vadd.f32 %v89, %v230
  %v232 = vpop.f32.mrf.mxu0
  %v233 = vadd.f32 %v89, %v232
  %234 = vmatmul.bf16.gmra.mxu0 %v189
  %v235 = vpop.f32.mrf.mxu0
  %v236 = vadd.f32 %v89, %v235
  %v237 = vpop.f32.mrf.mxu0
  %v238 = vadd.f32 %v89, %v237
  %239 = vmatmul.bf16.gmra.mxu0 %v192
  %v240 = vpop.f32.mrf.mxu0
  %v241 = vadd.f32 %v89, %v240
  %v242 = vpop.f32.mrf.mxu0
  %v243 = vadd.f32 %v89, %v242
  %244 = vmatmul.bf16.gmra.mxu0 %v195
  %v245 = vpop.f32.mrf.mxu0
  %v246 = vadd.f32 %v89, %v245
  %v247 = vpop.f32.mrf.mxu0
  %v248 = vadd.f32 %v89, %v247
  %249 = vdwg.mxu0
  %v250 = vmax.f32 %v211, 0.0
  %v251 = vmax.f32 %v213, 0.0
  %v252 = vmax.f32 %v216, 0.0
  %v253 = vmax.f32 %v218, 0.0
  %v254 = vmax.f32 %v221, 0.0
  %v255 = vmax.f32 %v223, 0.0
  %v256 = vmax.f32 %v226, 0.0
  %v257 = vmax.f32 %v228, 0.0
  %v258 = vmax.f32 %v231, 0.0
  %v259 = vmax.f32 %v233, 0.0
  %v260 = vmax.f32 %v236, 0.0
  %v261 = vmax.f32 %v238, 0.0
  %v262 = vmax.f32 %v241, 0.0
  %v263 = vmax.f32 %v243, 0.0
  %v264 = vmax.f32 %v246, 0.0
  %v265 = vmax.f32 %v248, 0.0
  %v266 = vpack.c.bf16 %v250, %v250
  %v267 = vpack.c.bf16 %v251, %v251
  %v268 = vpack.c.bf16 %v252, %v252
  %v269 = vpack.c.bf16 %v253, %v253
  %v270 = vpack.c.bf16 %v254, %v254
  %v271 = vpack.c.bf16 %v255, %v255
  %v272 = vpack.c.bf16 %v256, %v256
  %v273 = vpack.c.bf16 %v257, %v257
  %v274 = vpack.c.bf16 %v258, %v258
  %v275 = vpack.c.bf16 %v259, %v259
  %v276 = vpack.c.bf16 %v260, %v260
  %v277 = vpack.c.bf16 %v261, %v261
  %v278 = vpack.c.bf16 %v262, %v262
  %v279 = vpack.c.bf16 %v263, %v263
  %v280 = vpack.c.bf16 %v264, %v264
  %v281 = vpack.c.bf16 %v265, %v265
  %v283 = vperm.slane %v61, 0
  %v301 = vunpack.c.l.b16 %v266
  %v302 = vunpack.c.l.b16 %v267
  %v303 = vunpack.c.l.b16 %v268
  %v304 = vunpack.c.l.b16 %v269
  %v305 = vunpack.c.l.b16 %v270
  %v306 = vunpack.c.l.b16 %v271
  %v307 = vunpack.c.l.b16 %v272
  %v308 = vunpack.c.l.b16 %v273
  %v309 = vunpack.c.l.b16 %v274
  %v310 = vunpack.c.l.b16 %v275
  %v311 = vunpack.c.l.b16 %v276
  %v312 = vunpack.c.l.b16 %v277
  %v313 = vunpack.c.l.b16 %v278
  %v314 = vunpack.c.l.b16 %v279
  %v315 = vunpack.c.l.b16 %v280
  %v316 = vunpack.c.l.b16 %v281
  %v317 = vpack.c.b16 %v302, %v301
  %v318 = vpack.c.b16 %v304, %v303
  %v319 = vpack.c.b16 %v306, %v305
  %v320 = vpack.c.b16 %v308, %v307
  %v321 = vpack.c.b16 %v310, %v309
  %v322 = vpack.c.b16 %v312, %v311
  %v323 = vpack.c.b16 %v314, %v313
  %v324 = vpack.c.b16 %v316, %v315
  %v349 = vunpack.c.l.b16 %v45
  %v350 = vunpack.c.l.b16 %v46
  %v351 = vunpack.c.l.b16 %v47
  %v352 = vunpack.c.l.b16 %v48
  %v353 = vunpack.c.l.b16 %v49
  %v354 = vunpack.c.l.b16 %v50
  %v355 = vunpack.c.l.b16 %v51
  %v356 = vunpack.c.l.b16 %v52
  %v357 = vunpack.c.l.b16 %v53
  %v358 = vunpack.c.l.b16 %v54
  %v359 = vunpack.c.l.b16 %v55
  %v360 = vunpack.c.l.b16 %v56
  %v361 = vunpack.c.l.b16 %v57
  %v362 = vunpack.c.l.b16 %v58
  %v363 = vunpack.c.l.b16 %v59
  %v364 = vunpack.c.l.b16 %v60
  %v365 = vpack.c.b16 %v350, %v349
  %v366 = vpack.c.b16 %v352, %v351
  %v367 = vpack.c.b16 %v354, %v353
  %v368 = vpack.c.b16 %v356, %v355
  %v369 = vpack.c.b16 %v358, %v357
  %v370 = vpack.c.b16 %v360, %v359
  %v371 = vpack.c.b16 %v362, %v361
  %v372 = vpack.c.b16 %v364, %v363
  %381 = vmatpush.bf16.msra.mxu0 %v372
  %382 = vmatpush.bf16.msra.mxu0 %v371
  %383 = vmatpush.bf16.msra.mxu0 %v370
  %384 = vmatpush.bf16.msra.mxu0 %v369
  %385 = vmatpush.bf16.msra.mxu0 %v368
  %386 = vmatpush.bf16.msra.mxu0 %v367
  %387 = vmatpush.bf16.msra.mxu0 %v366
  %388 = vmatpush.bf16.msra.mxu0 %v365
  %389 = vmatmul.bf16.gmra.mxu0 %v317
  %v390 = vpop.f32.mrf.mxu0
  %v391 = vadd.f32 %v283, %v390
  %v392 = vpop.f32.mrf.mxu0
  %v393 = vadd.f32 %v283, %v392
  %394 = vmatmul.bf16.gmra.mxu0 %v318
  %v395 = vpop.f32.mrf.mxu0
  %v396 = vadd.f32 %v283, %v395
  %v397 = vpop.f32.mrf.mxu0
  %v398 = vadd.f32 %v283, %v397
  %399 = vmatmul.bf16.gmra.mxu0 %v319
  %v400 = vpop.f32.mrf.mxu0
  %v401 = vadd.f32 %v283, %v400
  %v402 = vpop.f32.mrf.mxu0
  %v403 = vadd.f32 %v283, %v402
  %404 = vmatmul.bf16.gmra.mxu0 %v320
  %v405 = vpop.f32.mrf.mxu0
  %v406 = vadd.f32 %v283, %v405
  %v407 = vpop.f32.mrf.mxu0
  %v408 = vadd.f32 %v283, %v407
  %409 = vmatmul.bf16.gmra.mxu0 %v321
  %v410 = vpop.f32.mrf.mxu0
  %v411 = vadd.f32 %v283, %v410
  %v412 = vpop.f32.mrf.mxu0
  %v413 = vadd.f32 %v283, %v412
  %414 = vmatmul.bf16.gmra.mxu0 %v322
  %v415 = vpop.f32.mrf.mxu0
  %v416 = vadd.f32 %v283, %v415
  %v417 = vpop.f32.mrf.mxu0
  %v418 = vadd.f32 %v283, %v417
  %419 = vmatmul.bf16.gmra.mxu0 %v323
  %v420 = vpop.f32.mrf.mxu0
  %v421 = vadd.f32 %v283, %v420
  %v422 = vpop.f32.mrf.mxu0
  %v423 = vadd.f32 %v283, %v422
  %424 = vmatmul.bf16.gmra.mxu0 %v324
  %v425 = vpop.f32.mrf.mxu0
  %v426 = vadd.f32 %v283, %v425
  %v427 = vpop.f32.mrf.mxu0
  %v428 = vadd.f32 %v283, %v427
  %429 = vdwg.mxu0
  %v430 = vmax.f32 %v391, 0.0
  %v431 = vmax.f32 %v393, 0.0
  %v432 = vmax.f32 %v396, 0.0
  %v433 = vmax.f32 %v398, 0.0
  %v434 = vmax.f32 %v401, 0.0
  %v435 = vmax.f32 %v403, 0.0
  %v436 = vmax.f32 %v406, 0.0
  %v437 = vmax.f32 %v408, 0.0
  %v438 = vmax.f32 %v411, 0.0
  %v439 = vmax.f32 %v413, 0.0
  %v440 = vmax.f32 %v416, 0.0
  %v441 = vmax.f32 %v418, 0.0
  %v442 = vmax.f32 %v421, 0.0
  %v443 = vmax.f32 %v423, 0.0
  %v444 = vmax.f32 %v426, 0.0
  %v445 = vmax.f32 %v428, 0.0
  %v446 = vpack.c.bf16 %v431, %v430
  %v447 = vpack.c.bf16 %v433, %v432
  %v448 = vpack.c.bf16 %v435, %v434
  %v449 = vpack.c.bf16 %v437, %v436
  %v450 = vpack.c.bf16 %v439, %v438
  %v451 = vpack.c.bf16 %v441, %v440
  %v452 = vpack.c.bf16 %v443, %v442
  %v453 = vpack.c.bf16 %v445, %v444
  %v455 = vperm.slane %v70, 0
  %v465 = vunpack.c.l.b16 %v62
  %v466 = vunpack.c.l.b16 %v63
  %v467 = vunpack.c.l.b16 %v64
  %v468 = vunpack.c.l.b16 %v65
  %v469 = vunpack.c.l.b16 %v66
  %v470 = vunpack.c.l.b16 %v67
  %v471 = vunpack.c.l.b16 %v68
  %v472 = vunpack.c.l.b16 %v69
  %v473 = vpack.c.b16 %v466, %v465
  %v474 = vpack.c.b16 %v468, %v467
  %v475 = vpack.c.b16 %v470, %v469
  %v476 = vpack.c.b16 %v472, %v471
  %vm481 = vcmask 523264
  %v483 = vsel %vm481, %v446, 0
  %v486 = vsel %vm481, %v447, 0
  %v489 = vsel %vm481, %v448, 0
  %v492 = vsel %vm481, %v449, 0
  %v495 = vsel %vm481, %v450, 0
  %v498 = vsel %vm481, %v451, 0
  %v501 = vsel %vm481, %v452, 0
  %v504 = vsel %vm481, %v453, 0
  %506 = vmatpush.bf16.msra.mxu0 0
  %507 = vmatpush.bf16.msra.mxu0 0
  %508 = vmatpush.bf16.msra.mxu0 0
  %509 = vmatpush.bf16.msra.mxu0 0
  %510 = vmatpush.bf16.msra.mxu0 %v476
  %511 = vmatpush.bf16.msra.mxu0 %v475
  %512 = vmatpush.bf16.msra.mxu0 %v474
  %513 = vmatpush.bf16.msra.mxu0 %v473
  %514 = vmatmul.bf16.gmra.mxu0 %v483
  %v515 = vpop.f32.mrf.mxu0
  %v516 = vadd.f32 %v455, %v515
  %v517 = vpop.f32.mrf.mxu0
  %v518 = vadd.f32 %v455, %v517
  %519 = vmatmul.bf16.gmra.mxu0 %v486
  %v520 = vpop.f32.mrf.mxu0
  %v521 = vadd.f32 %v455, %v520
  %v522 = vpop.f32.mrf.mxu0
  %v523 = vadd.f32 %v455, %v522
  %524 = vmatmul.bf16.gmra.mxu0 %v489
  %v525 = vpop.f32.mrf.mxu0
  %v526 = vadd.f32 %v455, %v525
  %v527 = vpop.f32.mrf.mxu0
  %v528 = vadd.f32 %v455, %v527
  %529 = vmatmul.bf16.gmra.mxu0 %v492
  %v530 = vpop.f32.mrf.mxu0
  %v531 = vadd.f32 %v455, %v530
  %v532 = vpop.f32.mrf.mxu0
  %v533 = vadd.f32 %v455, %v532
  %534 = vmatmul.bf16.gmra.mxu0 %v495
  %v535 = vpop.f32.mrf.mxu0
  %v536 = vadd.f32 %v455, %v535
  %v537 = vpop.f32.mrf.mxu0
  %v538 = vadd.f32 %v455, %v537
  %539 = vmatmul.bf16.gmra.mxu0 %v498
  %v540 = vpop.f32.mrf.mxu0
  %v541 = vadd.f32 %v455, %v540
  %v542 = vpop.f32.mrf.mxu0
  %v543 = vadd.f32 %v455, %v542
  %544 = vmatmul.bf16.gmra.mxu0 %v501
  %v545 = vpop.f32.mrf.mxu0
  %v546 = vadd.f32 %v455, %v545
  %v547 = vpop.f32.mrf.mxu0
  %v548 = vadd.f32 %v455, %v547
  %549 = vmatmul.bf16.gmra.mxu0 %v504
  %v550 = vpop.f32.mrf.mxu0
  %v551 = vadd.f32 %v455, %v550
  %v552 = vpop.f32.mrf.mxu0
  %v553 = vadd.f32 %v455, %v552
  %554 = vdwg.mxu0
  %v555 = vmax.f32 %v516, 0.0
  %v556 = vmax.f32 %v518, 0.0
  %v557 = vmax.f32 %v521, 0.0
  %v558 = vmax.f32 %v523, 0.0
  %v559 = vmax.f32 %v526, 0.0
  %v560 = vmax.f32 %v528, 0.0
  %v561 = vmax.f32 %v531, 0.0
  %v562 = vmax.f32 %v533, 0.0
  %v563 = vmax.f32 %v536, 0.0
  %v564 = vmax.f32 %v538, 0.0
  %v565 = vmax.f32 %v541, 0.0
  %v566 = vmax.f32 %v543, 0.0
  %v567 = vmax.f32 %v546, 0.0
  %v568 = vmax.f32 %v548, 0.0
  %v569 = vmax.f32 %v551, 0.0
  %v570 = vmax.f32 %v553, 0.0
  %v571 = vand.u32 2147483647, %v516
  %v572 = vand.u32 2147483647, %v518
  %v573 = vand.u32 2147483647, %v521
  %v574 = vand.u32 2147483647, %v523
  %v575 = vand.u32 2147483647, %v526
  %v576 = vand.u32 2147483647, %v528
  %v577 = vand.u32 2147483647, %v531
  %v578 = vand.u32 2147483647, %v533
  %v579 = vand.u32 2147483647, %v536
  %v580 = vand.u32 2147483647, %v538
  %v581 = vand.u32 2147483647, %v541
  %v582 = vand.u32 2147483647, %v543
  %v583 = vand.u32 2147483647, %v546
  %v584 = vand.u32 2147483647, %v548
  %v585 = vand.u32 2147483647, %v551
  %v586 = vand.u32 2147483647, %v553
  %v587 = vsub.f32 0.0, %v571
  %v588 = vsub.f32 0.0, %v572
  %v589 = vsub.f32 0.0, %v573
  %v590 = vsub.f32 0.0, %v574
  %v591 = vsub.f32 0.0, %v575
  %v592 = vsub.f32 0.0, %v576
  %v593 = vsub.f32 0.0, %v577
  %v594 = vsub.f32 0.0, %v578
  %v595 = vsub.f32 0.0, %v579
  %v596 = vsub.f32 0.0, %v580
  %v597 = vsub.f32 0.0, %v581
  %v598 = vsub.f32 0.0, %v582
  %v599 = vsub.f32 0.0, %v583
  %v600 = vsub.f32 0.0, %v584
  %v601 = vsub.f32 0.0, %v585
  %v602 = vsub.f32 0.0, %v586
  %v603 = vmul.f32 %v587, 1.442695
  %v604 = vpow.pop %v603
  %v605 = vmul.f32 %v588, 1.442695
  %v606 = vpow.pop %v605
  %v607 = vmul.f32 %v589, 1.442695
  %v608 = vpow.pop %v607
  %v609 = vmul.f32 %v590, 1.442695
  %v610 = vpow.pop %v609
  %v611 = vmul.f32 %v591, 1.442695
  %v612 = vpow.pop %v611
  %v613 = vmul.f32 %v592, 1.442695
  %v614 = vpow.pop %v613
  %v615 = vmul.f32 %v593, 1.442695
  %v616 = vpow.pop %v615
  %v617 = vmul.f32 %v594, 1.442695
  %v618 = vpow.pop %v617
  %v619 = vmul.f32 %v595, 1.442695
  %v620 = vpow.pop %v619
  %v621 = vmul.f32 %v596, 1.442695
  %v622 = vpow.pop %v621
  %v623 = vmul.f32 %v597, 1.442695
  %v624 = vpow.pop %v623
  %v625 = vmul.f32 %v598, 1.442695
  %v626 = vpow.pop %v625
  %v627 = vmul.f32 %v599, 1.442695
  %v628 = vpow.pop %v627
  %v629 = vmul.f32 %v600, 1.442695
  %v630 = vpow.pop %v629
  %v631 = vmul.f32 %v601, 1.442695
  %v632 = vpow.pop %v631
  %v633 = vmul.f32 %v602, 1.442695
  %v634 = vpow.pop %v633
  %v635 = vadd.f32 %v604, 1.0
  %v636 = vlog2.pop %v635
  %v637 = vmul.f32 %v636, 0.6931472
  %v638 = vmul.f32 -0.5, %v604
  %v639 = vadd.f32 %v638, 1.0
  %v640 = vmul.f32 %v639, %v604
  %v641 = vand.u32 2147483647, %v604
  %vm642 = vcmp.lt.f32.partialorder %v641, 0.0004427343
  %v643 = vsel %vm642, %v640, %v637
  %v644 = vadd.f32 %v606, 1.0
  %v645 = vlog2.pop %v644
  %v646 = vmul.f32 %v645, 0.6931472
  %v647 = vmul.f32 -0.5, %v606
  %v648 = vadd.f32 %v647, 1.0
  %v649 = vmul.f32 %v648, %v606
  %v650 = vand.u32 2147483647, %v606
  %vm651 = vcmp.lt.f32.partialorder %v650, 0.0004427343
  %v652 = vsel %vm651, %v649, %v646
  %v653 = vadd.f32 %v608, 1.0
  %v654 = vlog2.pop %v653
  %v655 = vmul.f32 %v654, 0.6931472
  %v656 = vmul.f32 -0.5, %v608
  %v657 = vadd.f32 %v656, 1.0
  %v658 = vmul.f32 %v657, %v608
  %v659 = vand.u32 2147483647, %v608
  %vm660 = vcmp.lt.f32.partialorder %v659, 0.0004427343
  %v661 = vsel %vm660, %v658, %v655
  %v662 = vadd.f32 %v610, 1.0
  %v663 = vlog2.pop %v662
  %v664 = vmul.f32 %v663, 0.6931472
  %v665 = vmul.f32 -0.5, %v610
  %v666 = vadd.f32 %v665, 1.0
  %v667 = vmul.f32 %v666, %v610
  %v668 = vand.u32 2147483647, %v610
  %vm669 = vcmp.lt.f32.partialorder %v668, 0.0004427343
  %v670 = vsel %vm669, %v667, %v664
  %v671 = vadd.f32 %v612, 1.0
  %v672 = vlog2.pop %v671
  %v673 = vmul.f32 %v672, 0.6931472
  %v674 = vmul.f32 -0.5, %v612
  %v675 = vadd.f32 %v674, 1.0
  %v676 = vmul.f32 %v675, %v612
  %v677 = vand.u32 2147483647, %v612
  %vm678 = vcmp.lt.f32.partialorder %v677, 0.0004427343
  %v679 = vsel %vm678, %v676, %v673
  %v680 = vadd.f32 %v614, 1.0
  %v681 = vlog2.pop %v680
  %v682 = vmul.f32 %v681, 0.6931472
  %v683 = vmul.f32 -0.5, %v614
  %v684 = vadd.f32 %v683, 1.0
  %v685 = vmul.f32 %v684, %v614
  %v686 = vand.u32 2147483647, %v614
  %vm687 = vcmp.lt.f32.partialorder %v686, 0.0004427343
  %v688 = vsel %vm687, %v685, %v682
  %v689 = vadd.f32 %v616, 1.0
  %v690 = vlog2.pop %v689
  %v691 = vmul.f32 %v690, 0.6931472
  %v692 = vmul.f32 -0.5, %v616
  %v693 = vadd.f32 %v692, 1.0
  %v694 = vmul.f32 %v693, %v616
  %v695 = vand.u32 2147483647, %v616
  %vm696 = vcmp.lt.f32.partialorder %v695, 0.0004427343
  %v697 = vsel %vm696, %v694, %v691
  %v698 = vadd.f32 %v618, 1.0
  %v699 = vlog2.pop %v698
  %v700 = vmul.f32 %v699, 0.6931472
  %v701 = vmul.f32 -0.5, %v618
  %v702 = vadd.f32 %v701, 1.0
  %v703 = vmul.f32 %v702, %v618
  %v704 = vand.u32 2147483647, %v618
  %vm705 = vcmp.lt.f32.partialorder %v704, 0.0004427343
  %v706 = vsel %vm705, %v703, %v700
  %v707 = vadd.f32 %v620, 1.0
  %v708 = vlog2.pop %v707
  %v709 = vmul.f32 %v708, 0.6931472
  %v710 = vmul.f32 -0.5, %v620
  %v711 = vadd.f32 %v710, 1.0
  %v712 = vmul.f32 %v711, %v620
  %v713 = vand.u32 2147483647, %v620
  %vm714 = vcmp.lt.f32.partialorder %v713, 0.0004427343
  %v715 = vsel %vm714, %v712, %v709
  %v716 = vadd.f32 %v622, 1.0
  %v717 = vlog2.pop %v716
  %v718 = vmul.f32 %v717, 0.6931472
  %v719 = vmul.f32 -0.5, %v622
  %v720 = vadd.f32 %v719, 1.0
  %v721 = vmul.f32 %v720, %v622
  %v722 = vand.u32 2147483647, %v622
  %vm723 = vcmp.lt.f32.partialorder %v722, 0.0004427343
  %v724 = vsel %vm723, %v721, %v718
  %v725 = vadd.f32 %v624, 1.0
  %v726 = vlog2.pop %v725
  %v727 = vmul.f32 %v726, 0.6931472
  %v728 = vmul.f32 -0.5, %v624
  %v729 = vadd.f32 %v728, 1.0
  %v730 = vmul.f32 %v729, %v624
  %v731 = vand.u32 2147483647, %v624
  %vm732 = vcmp.lt.f32.partialorder %v731, 0.0004427343
  %v733 = vsel %vm732, %v730, %v727
  %v734 = vadd.f32 %v626, 1.0
  %v735 = vlog2.pop %v734
  %v736 = vmul.f32 %v735, 0.6931472
  %v737 = vmul.f32 -0.5, %v626
  %v738 = vadd.f32 %v737, 1.0
  %v739 = vmul.f32 %v738, %v626
  %v740 = vand.u32 2147483647, %v626
  %vm741 = vcmp.lt.f32.partialorder %v740, 0.0004427343
  %v742 = vsel %vm741, %v739, %v736
  %v743 = vadd.f32 %v628, 1.0
  %v744 = vlog2.pop %v743
  %v745 = vmul.f32 %v744, 0.6931472
  %v746 = vmul.f32 -0.5, %v628
  %v747 = vadd.f32 %v746, 1.0
  %v748 = vmul.f32 %v747, %v628
  %v749 = vand.u32 2147483647, %v628
  %vm750 = vcmp.lt.f32.partialorder %v749, 0.0004427343
  %v751 = vsel %vm750, %v748, %v745
  %v752 = vadd.f32 %v630, 1.0
  %v753 = vlog2.pop %v752
  %v754 = vmul.f32 %v753, 0.6931472
  %v755 = vmul.f32 -0.5, %v630
  %v756 = vadd.f32 %v755, 1.0
  %v757 = vmul.f32 %v756, %v630
  %v758 = vand.u32 2147483647, %v630
  %vm759 = vcmp.lt.f32.partialorder %v758, 0.0004427343
  %v760 = vsel %vm759, %v757, %v754
  %v761 = vadd.f32 %v632, 1.0
  %v762 = vlog2.pop %v761
  %v763 = vmul.f32 %v762, 0.6931472
  %v764 = vmul.f32 -0.5, %v632
  %v765 = vadd.f32 %v764, 1.0
  %v766 = vmul.f32 %v765, %v632
  %v767 = vand.u32 2147483647, %v632
  %vm768 = vcmp.lt.f32.partialorder %v767, 0.0004427343
  %v769 = vsel %vm768, %v766, %v763
  %v770 = vadd.f32 %v634, 1.0
  %v771 = vlog2.pop %v770
  %v772 = vmul.f32 %v771, 0.6931472
  %v773 = vmul.f32 -0.5, %v634
  %v774 = vadd.f32 %v773, 1.0
  %v775 = vmul.f32 %v774, %v634
  %v776 = vand.u32 2147483647, %v634
  %vm777 = vcmp.lt.f32.partialorder %v776, 0.0004427343
  %v778 = vsel %vm777, %v775, %v772
  %v779 = vadd.f32 %v555, %v643
  %v780 = vadd.f32 %v556, %v652
  %v781 = vadd.f32 %v557, %v661
  %v782 = vadd.f32 %v558, %v670
  %v783 = vadd.f32 %v559, %v679
  %v784 = vadd.f32 %v560, %v688
  %v785 = vadd.f32 %v561, %v697
  %v786 = vadd.f32 %v562, %v706
  %v787 = vadd.f32 %v563, %v715
  %v788 = vadd.f32 %v564, %v724
  %v789 = vadd.f32 %v565, %v733
  %v790 = vadd.f32 %v566, %v742
  %v791 = vadd.f32 %v567, %v751
  %v792 = vadd.f32 %v568, %v760
  %v793 = vadd.f32 %v569, %v769
  %v794 = vadd.f32 %v570, %v778
  %v795 = vsub.f32 %v779, 0.85
  %v796 = vsub.f32 %v780, 0.85
  %v797 = vsub.f32 %v781, 0.85
  %v798 = vsub.f32 %v782, 0.85
  %v799 = vsub.f32 %v783, 0.85
  %v800 = vsub.f32 %v784, 0.85
  %v801 = vsub.f32 %v785, 0.85
  %v802 = vsub.f32 %v786, 0.85
  %v803 = vsub.f32 %v787, 0.85
  %v804 = vsub.f32 %v788, 0.85
  %v805 = vsub.f32 %v789, 0.85
  %v806 = vsub.f32 %v790, 0.85
  %v807 = vsub.f32 %v791, 0.85
  %v808 = vsub.f32 %v792, 0.85
  %v809 = vsub.f32 %v793, 0.85
  %v810 = vsub.f32 %v794, 0.85
  %v811 = vmul.f32 %v795, 100.0
  %v812 = vmul.f32 %v796, 100.0
  %v813 = vmul.f32 %v797, 100.0
  %v814 = vmul.f32 %v798, 100.0
  %v815 = vmul.f32 %v799, 100.0
  %v816 = vmul.f32 %v800, 100.0
  %v817 = vmul.f32 %v801, 100.0
  %v818 = vmul.f32 %v802, 100.0
  %v819 = vmul.f32 %v803, 100.0
  %v820 = vmul.f32 %v804, 100.0
  %v821 = vmul.f32 %v805, 100.0
  %v822 = vmul.f32 %v806, 100.0
  %v823 = vmul.f32 %v807, 100.0
  %v824 = vmul.f32 %v808, 100.0
  %v825 = vmul.f32 %v809, 100.0
  %v826 = vmul.f32 %v810, 100.0
  %v827 = vmul.f32 %v811, 0.5
  %v828 = vmul.f32 %v812, 0.5
  %v829 = vmul.f32 %v813, 0.5
  %v830 = vmul.f32 %v814, 0.5
  %v831 = vmul.f32 %v815, 0.5
  %v832 = vmul.f32 %v816, 0.5
  %v833 = vmul.f32 %v817, 0.5
  %v834 = vmul.f32 %v818, 0.5
  %v835 = vmul.f32 %v819, 0.5
  %v836 = vmul.f32 %v820, 0.5
  %v837 = vmul.f32 %v821, 0.5
  %v838 = vmul.f32 %v822, 0.5
  %v839 = vmul.f32 %v823, 0.5
  %v840 = vmul.f32 %v824, 0.5
  %v841 = vmul.f32 %v825, 0.5
  %v842 = vmul.f32 %v826, 0.5
  %v843 = vtanh.pop %v827
  %v844 = vtanh.pop %v828
  %v845 = vtanh.pop %v829
  %v846 = vtanh.pop %v830
  %v847 = vtanh.pop %v831
  %v848 = vtanh.pop %v832
  %v849 = vtanh.pop %v833
  %v850 = vtanh.pop %v834
  %v851 = vtanh.pop %v835
  %v852 = vtanh.pop %v836
  %v853 = vtanh.pop %v837
  %v854 = vtanh.pop %v838
  %v855 = vtanh.pop %v839
  %v856 = vtanh.pop %v840
  %v857 = vtanh.pop %v841
  %v858 = vtanh.pop %v842
  %v859 = vadd.f32 %v843, 1.0
  %v860 = vadd.f32 %v844, 1.0
  %v861 = vadd.f32 %v845, 1.0
  %v862 = vadd.f32 %v846, 1.0
  %v863 = vadd.f32 %v847, 1.0
  %v864 = vadd.f32 %v848, 1.0
  %v865 = vadd.f32 %v849, 1.0
  %v866 = vadd.f32 %v850, 1.0
  %v867 = vadd.f32 %v851, 1.0
  %v868 = vadd.f32 %v852, 1.0
  %v869 = vadd.f32 %v853, 1.0
  %v870 = vadd.f32 %v854, 1.0
  %v871 = vadd.f32 %v855, 1.0
  %v872 = vadd.f32 %v856, 1.0
  %v873 = vadd.f32 %v857, 1.0
  %v874 = vadd.f32 %v858, 1.0
  %v875 = vmul.f32 %v859, 0.5
  %v876 = vmul.f32 %v860, 0.5
  %v877 = vmul.f32 %v861, 0.5
  %v878 = vmul.f32 %v862, 0.5
  %v879 = vmul.f32 %v863, 0.5
  %v880 = vmul.f32 %v864, 0.5
  %v881 = vmul.f32 %v865, 0.5
  %v882 = vmul.f32 %v866, 0.5
  %v883 = vmul.f32 %v867, 0.5
  %v884 = vmul.f32 %v868, 0.5
  %v885 = vmul.f32 %v869, 0.5
  %v886 = vmul.f32 %v870, 0.5
  %v887 = vmul.f32 %v871, 0.5
  %v888 = vmul.f32 %v872, 0.5
  %v889 = vmul.f32 %v873, 0.5
  %v890 = vmul.f32 %v874, 0.5
  %vm891 = vcmask 31744
  %v893 = vsel %vm891, %v875, 0
  %v896 = vsel %vm891, %v876, 0
  %v899 = vsel %vm891, %v877, 0
  %v902 = vsel %vm891, %v878, 0
  %v905 = vsel %vm891, %v879, 0
  %v908 = vsel %vm891, %v880, 0
  %v911 = vsel %vm891, %v881, 0
  %v914 = vsel %vm891, %v882, 0
  %v917 = vsel %vm891, %v883, 0
  %v920 = vsel %vm891, %v884, 0
  %v923 = vsel %vm891, %v885, 0
  %v926 = vsel %vm891, %v886, 0
  %v929 = vsel %vm891, %v887, 0
  %v932 = vsel %vm891, %v888, 0
  %v935 = vsel %vm891, %v889, 0
  %v938 = vsel %vm891, %v890, 0
  %vm940 = vcmask 1043456
  %v942 = vsel %vm940, %v71, 0
  %944 = vmatpush.msra.mxu0 0.0
  %945 = vmatpush.msra.mxu0 0.0
  %946 = vmatpush.msra.mxu0 0.0
  %947 = vmatpush.msra.mxu0 0.0
  %948 = vmatpush.msra.mxu0 0.0
  %949 = vmatpush.msra.mxu0 0.0
  %950 = vmatpush.msra.mxu0 0.0
  %951 = vmatpush.msra.mxu0 0.0
  %952 = vmatpush.msra.mxu0 0.0
  %953 = vmatpush.msra.mxu0 0.0
  %954 = vmatpush.msra.mxu0 0.0
  %955 = vmatpush.msra.mxu0 0.0
  %956 = vmatpush.msra.mxu0 0.0
  %957 = vmatpush.msra.mxu0 0.0
  %958 = vmatpush.msra.mxu0 0.0
  %959 = vmatpush.msra.mxu0 %v942
  %960 = vmatmul.f32.gmra.mxu0 %v893
  %v961 = vpop.f32.mrf.mxu0
  %v962 = vadd.f32 0.0, %v961
  %963 = vmatmul.f32.gmra.mxu0 %v896
  %v964 = vpop.f32.mrf.mxu0
  %v965 = vadd.f32 0.0, %v964
  %966 = vmatmul.f32.gmra.mxu0 %v899
  %v967 = vpop.f32.mrf.mxu0
  %v968 = vadd.f32 0.0, %v967
  %969 = vmatmul.f32.gmra.mxu0 %v902
  %v970 = vpop.f32.mrf.mxu0
  %v971 = vadd.f32 0.0, %v970
  %972 = vmatmul.f32.gmra.mxu0 %v905
  %v973 = vpop.f32.mrf.mxu0
  %v974 = vadd.f32 0.0, %v973
  %975 = vmatmul.f32.gmra.mxu0 %v908
  %v976 = vpop.f32.mrf.mxu0
  %v977 = vadd.f32 0.0, %v976
  %978 = vmatmul.f32.gmra.mxu0 %v911
  %v979 = vpop.f32.mrf.mxu0
  %v980 = vadd.f32 0.0, %v979
  %981 = vmatmul.f32.gmra.mxu0 %v914
  %v982 = vpop.f32.mrf.mxu0
  %v983 = vadd.f32 0.0, %v982
  %984 = vmatmul.f32.gmra.mxu0 %v917
  %v985 = vpop.f32.mrf.mxu0
  %v986 = vadd.f32 0.0, %v985
  %987 = vmatmul.f32.gmra.mxu0 %v920
  %v988 = vpop.f32.mrf.mxu0
  %v989 = vadd.f32 0.0, %v988
  %990 = vmatmul.f32.gmra.mxu0 %v923
  %v991 = vpop.f32.mrf.mxu0
  %v992 = vadd.f32 0.0, %v991
  %993 = vmatmul.f32.gmra.mxu0 %v926
  %v994 = vpop.f32.mrf.mxu0
  %v995 = vadd.f32 0.0, %v994
  %996 = vmatmul.f32.gmra.mxu0 %v929
  %v997 = vpop.f32.mrf.mxu0
  %v998 = vadd.f32 0.0, %v997
  %999 = vmatmul.f32.gmra.mxu0 %v932
  %v1000 = vpop.f32.mrf.mxu0
  %v1001 = vadd.f32 0.0, %v1000
  %1002 = vmatmul.f32.gmra.mxu0 %v935
  %v1003 = vpop.f32.mrf.mxu0
  %v1004 = vadd.f32 0.0, %v1003
  %1005 = vmatmul.f32.gmra.mxu0 %v938
  %v1006 = vpop.f32.mrf.mxu0
  %v1007 = vadd.f32 0.0, %v1006
  %1008 = vdwg.mxu0
  %v1009 = vunpack.c.l.bf16 %v266
  %v1010 = vunpack.c.l.bf16 %v267
  %v1011 = vunpack.c.l.bf16 %v268
  %v1012 = vunpack.c.l.bf16 %v269
  %v1013 = vunpack.c.l.bf16 %v270
  %v1014 = vunpack.c.l.bf16 %v271
  %v1015 = vunpack.c.l.bf16 %v272
  %v1016 = vunpack.c.l.bf16 %v273
  %v1017 = vunpack.c.l.bf16 %v274
  %v1018 = vunpack.c.l.bf16 %v275
  %v1019 = vunpack.c.l.bf16 %v276
  %v1020 = vunpack.c.l.bf16 %v277
  %v1021 = vunpack.c.l.bf16 %v278
  %v1022 = vunpack.c.l.bf16 %v279
  %v1023 = vunpack.c.l.bf16 %v280
  %v1024 = vunpack.c.l.bf16 %v281
  %v1025 = vmul.f32 %v962, %v1009
  %v1026 = vmul.f32 %v965, %v1010
  %v1027 = vmul.f32 %v968, %v1011
  %v1028 = vmul.f32 %v971, %v1012
  %v1029 = vmul.f32 %v974, %v1013
  %v1030 = vmul.f32 %v977, %v1014
  %v1031 = vmul.f32 %v980, %v1015
  %v1032 = vmul.f32 %v983, %v1016
  %v1033 = vmul.f32 %v986, %v1017
  %v1034 = vmul.f32 %v989, %v1018
  %v1035 = vmul.f32 %v992, %v1019
  %v1036 = vmul.f32 %v995, %v1020
  %v1037 = vmul.f32 %v998, %v1021
  %v1038 = vmul.f32 %v1001, %v1022
  %v1039 = vmul.f32 %v1004, %v1023
  %v1040 = vmul.f32 %v1007, %v1024
  %v1041 = vpack.c.bf16 %v1025, %v1025
  %v1042 = vpack.c.bf16 %v1026, %v1026
  %v1043 = vpack.c.bf16 %v1027, %v1027
  %v1044 = vpack.c.bf16 %v1028, %v1028
  %v1045 = vpack.c.bf16 %v1029, %v1029
  %v1046 = vpack.c.bf16 %v1030, %v1030
  %v1047 = vpack.c.bf16 %v1031, %v1031
  %v1048 = vpack.c.bf16 %v1032, %v1032
  %v1049 = vpack.c.bf16 %v1033, %v1033
  %v1050 = vpack.c.bf16 %v1034, %v1034
  %v1051 = vpack.c.bf16 %v1035, %v1035
  %v1052 = vpack.c.bf16 %v1036, %v1036
  %v1053 = vpack.c.bf16 %v1037, %v1037
  %v1054 = vpack.c.bf16 %v1038, %v1038
  %v1055 = vpack.c.bf16 %v1039, %v1039
  %v1056 = vpack.c.bf16 %v1040, %v1040
  %1057 = vst [vmem:[%s8] sm:$0xf] %v1041
  %1058 = vst [vmem:[%s8 + $0x4] sm:$0xf] %v1042
  %1059 = vst [vmem:[%s8 + $0x8] sm:$0xf] %v1043
  %1060 = vst [vmem:[%s8 + $0xc] sm:$0xf] %v1044
  %1061 = vst [vmem:[%s8 + $0x10] sm:$0xf] %v1045
  %1062 = vst [vmem:[%s8 + $0x14] sm:$0xf] %v1046
  %1063 = vst [vmem:[%s8 + $0x18] sm:$0xf] %v1047
  %1064 = vst [vmem:[%s8 + $0x1c] sm:$0xf] %v1048
  %1065 = vst [vmem:[%s8 + $0x20] sm:$0xf] %v1049
  %1066 = vst [vmem:[%s8 + $0x24] sm:$0xf] %v1050
  %1067 = vst [vmem:[%s8 + $0x28] sm:$0xf] %v1051
  %1068 = vst [vmem:[%s8 + $0x2c] sm:$0xf] %v1052
  %1069 = vst [vmem:[%s8 + $0x30] sm:$0xf] %v1053
  %1070 = vst [vmem:[%s8 + $0x34] sm:$0xf] %v1054
  %1071 = vst [vmem:[%s8 + $0x38] sm:$0xf] %v1055
  %1072 = vst [vmem:[%s8 + $0x3c] sm:$0xf] %v1056
  // Predicated region
  $region34: #{segment_forward.1} parent=0 // pred_check
    _
  $region35: #{segment_forward.1} parent=0 // pred_check_branch
    %1074 = sbr.rel (0) target = $region37
  $region36: #{segment_forward.1} parent=0 // pred_region
    _
  $region37: #{segment_forward.1} parent=0 // pred_fallthru
    _
  // Predicated region
  $region38: #{segment_forward.1} parent=0 // pred_check
    _
  $region39: #{segment_forward.1} parent=0 // pred_check_branch
    %1076 = sbr.rel (0) target = $region41
  $region40: #{segment_forward.1} parent=0 // pred_region
    _
  $region41: #{segment_forward.1} parent=0 // pred_fallthru
    _

</llo_original>
